<compile_context>
chip_gen: v6e
topology: v6e:2x2x1
jax: 0.10.0
libtpu: 0.0.40
codegen_flags: <defaults>
</compile_context>

<pallas_src>
import functools

import jax
import jax.numpy as jnp
from jax.experimental import pallas as pl
from jax.experimental.pallas import tpu as pltpu


def _round_up(x: int, m: int) -> int:
    return ((x + m - 1) // m) * m


def actor_forward_kernel(x_ref, w1_ref, b1_ref, w2_ref, b2_ref, o_ref):
    # In-kernel cast of the activation tile to the matmul dtype (no-op on the
    # f32 path); avoids a separate convert pass over the activations in HBM.
    x = x_ref[...].astype(w1_ref.dtype)
    # Layer 1: [TM, K] @ [K, 256] -> f32 acc, bias-add + tanh in f32.
    h1 = jnp.dot(x, w1_ref[...], preferred_element_type=jnp.float32)
    h1 = jnp.tanh(h1 + b1_ref[...])
    # Layer 2: [TM, 256] @ [256, 128] -> f32 acc, bias-add + tanh in f32.
    h2 = jnp.dot(h1.astype(w2_ref.dtype), w2_ref[...],
                 preferred_element_type=jnp.float32)
    o_ref[...] = jnp.tanh(h2 + b2_ref[...]).astype(o_ref.dtype)


@functools.partial(jax.jit, static_argnames=("block_m", "out_dtype"))
def actor_forward(state, w1, b1, w2, b2, *, block_m=1024, out_dtype=jnp.float32):
    """Pallas Actor.forward.

    state: [B, K] f32; w1: [K, 256]; b1: [1, 256]; w2: [256, 128]; b2: [1, 128].
    Weights are stored pre-transposed ([in, out]) and pre-cast to the desired
    matmul dtype (f32 or bf16) by the caller; biases stay f32.
    Returns [B, 128] in `out_dtype`.
    """
    B, K = state.shape
    H1 = w1.shape[1]
    H2 = w2.shape[1]

    # --- batch tiling --------------------------------------------------------
    # 8-row alignment suffices for f32 tiles; 16 when the output is bf16.
    align = 16 if jnp.dtype(out_dtype) == jnp.dtype(jnp.bfloat16) else 8
    b_aligned = _round_up(B, align)
    tm = min(_round_up(block_m, align), b_aligned)
    # Ensure >= 2 grid steps when the batch allows it (dual-TC on v7x).
    half = _round_up((B + 1) // 2, align)
    if b_aligned >= 2 * align and tm > half:
        tm = half
    B_pad = _round_up(B, tm)
    grid = (B_pad // tm,)

    # --- operand preparation (batch pad only when actually needed) ----------
    x = state
    if B_pad != B:
        x = jnp.pad(state, ((0, B_pad - B), (0, 0)))

    w_itemsize = jnp.dtype(w1.dtype).itemsize
    out_itemsize = jnp.dtype(out_dtype).itemsize
    cost = pl.CostEstimate(
        flops=2 * B_pad * (K * H1 + H1 * H2),
        transcendentals=B_pad * (H1 + H2),
        bytes_accessed=(B_pad * K * jnp.dtype(state.dtype).itemsize   # x
                        + K * H1 * w_itemsize                         # w1
                        + H1 * H2 * w_itemsize                        # w2
                        + (H1 + H2) * 4                               # biases
                        + B_pad * H2 * out_itemsize),                 # out
    )

    out = pl.pallas_call(
        actor_forward_kernel,
        out_shape=jax.ShapeDtypeStruct((B_pad, H2), out_dtype),
        grid_spec=pltpu.PrefetchScalarGridSpec(
            num_scalar_prefetch=0,
            grid=grid,
            in_specs=[
                # Activations: tiled along batch, pipelined across grid steps.
                # Last block dim == full array dim (K), so no 128-alignment
                # or padding of the contraction axis is required.
                pl.BlockSpec((tm, K), lambda i: (i, 0)),
                # Weights / biases: same block every step -> VMEM-resident.
                pl.BlockSpec((K, H1), lambda i: (0, 0)),
                pl.BlockSpec((1, H1), lambda i: (0, 0)),
                pl.BlockSpec((H1, H2), lambda i: (0, 0)),
                pl.BlockSpec((1, H2), lambda i: (0, 0)),
            ],
            out_specs=pl.BlockSpec((tm, H2), lambda i: (i, 0)),
        ),
        compiler_params=pltpu.CompilerParams(
            dimension_semantics=("parallel",),   # dual-TC sharding on v7x
        ),
        cost_estimate=cost,
    )(x, w1, b1, w2, b2)

    if B_pad != B:
        out = out[:B]
    return out


def init_linear_params(key, in_features, out_features):
    """Deterministic init mimicking nn.Linear default (uniform +/- 1/sqrt(in))."""
    kw, kb = jax.random.split(key)
    bound = 1.0 / jnp.sqrt(jnp.float32(in_features))
    # Stored as [in, out] (transposed vs. PyTorch's [out, in]) for x @ W.
    w = jax.random.uniform(kw, (in_features, out_features), jnp.float32,
                           minval=-bound, maxval=bound)
    b = jax.random.uniform(kb, (1, out_features), jnp.float32,
                           minval=-bound, maxval=bound)
    return w, b


def reference_forward(state, w1, b1, w2, b2):
    h1 = jnp.tanh(state @ w1 + b1)
    return jnp.tanh(h1 @ w2 + b2)


if __name__ == "__main__":
    key = jax.random.PRNGKey(0)
    k_x, k_l1, k_l2, k_big = jax.random.split(key, 4)

    # Small shapes consistent with the module: state vector size is
    # environment-dependent; pick a modest feature dim.
    batch = 8
    linear_input_size = 32
    hidden1, hidden2 = 256, 128

    state = jax.random.normal(k_x, (batch, linear_input_size), jnp.float32)
    w1, b1 = init_linear_params(k_l1, linear_input_size, hidden1)
    w2, b2 = init_linear_params(k_l2, hidden1, hidden2)
    ref = reference_forward(state, w1, b1, w2, b2)

    # 1) f32 path (strict tolerance).
    out = actor_forward(state, w1, b1, w2, b2)
    out = jax.block_until_ready(out)
    assert out.shape == (batch, hidden2)
    assert jnp.allclose(out, ref, atol=1e-5, rtol=1e-5), "f32 mismatch vs reference"

    # 2) bf16 matmul-operand path with bf16 output (weights pre-cast once,
    #    outside the per-call jit; f32 accumulation / bias / tanh) — looser tol.
    w1_bf16 = w1.astype(jnp.bfloat16)
    w2_bf16 = w2.astype(jnp.bfloat16)
    out_bf16 = actor_forward(state, w1_bf16, b1, w2_bf16, b2,
                             out_dtype=jnp.bfloat16)
    out_bf16 = jax.block_until_ready(out_bf16)
    assert out_bf16.dtype == jnp.bfloat16
    assert jnp.allclose(out_bf16.astype(jnp.float32), ref,
                        atol=5e-2, rtol=5e-2), "bf16 mismatch vs reference"

    # 3) Larger, ragged batch exercising a multi-step grid (weights resident
    #    across steps, padded last tile sliced off, >=2 parallel grid steps).
    big_batch = 300
    state_big = jax.random.normal(k_big, (big_batch, linear_input_size), jnp.float32)
    ref_big = reference_forward(state_big, w1, b1, w2, b2)
    out_big = actor_forward(state_big, w1, b1, w2, b2)
    out_big = jax.block_until_ready(out_big)
    assert out_big.shape == (big_batch, hidden2)
    assert jnp.allclose(out_big, ref_big, atol=1e-5, rtol=1e-5), "batched mismatch vs reference"

    print("KERNEL_OK")
</pallas_src>

<mosaic_0001>
module attributes {stable_mosaic.version = 11 : i64} {
  func.func @actor_forward_kernel(%arg0: i32, %arg1: memref<8x32xf32, #tpu.memory_space<vmem>>, %arg2: memref<32x256xf32, #tpu.memory_space<vmem>>, %arg3: memref<1x256xf32, #tpu.memory_space<vmem>>, %arg4: memref<256x128xf32, #tpu.memory_space<vmem>>, %arg5: memref<1x128xf32, #tpu.memory_space<vmem>>, %arg6: memref<8x128xf32, #tpu.memory_space<vmem>>) attributes {dimension_semantics = [#tpu.dimension_semantics<parallel>], iteration_bounds = array<i64: 1>, scalar_prefetch = 0 : i64, scratch_operands = 0 : i64, tpu.core_type = #tpu.core_type<tc>, window_params = [{transform_indices = @transform_0, window_bounds = array<i64: 8, 32>}, {pipeline_mode = #tpu.pipeline_mode<synchronous>, transform_indices = @transform_1, window_bounds = array<i64: 32, 256>}, {pipeline_mode = #tpu.pipeline_mode<synchronous>, transform_indices = @transform_2, window_bounds = array<i64: 1, 256>}, {pipeline_mode = #tpu.pipeline_mode<synchronous>, transform_indices = @transform_3, window_bounds = array<i64: 256, 128>}, {pipeline_mode = #tpu.pipeline_mode<synchronous>, transform_indices = @transform_4, window_bounds = array<i64: 1, 128>}, {transform_indices = @transform_5, window_bounds = array<i64: 8, 128>}]} {
    %c0 = arith.constant 0 : index
    %c0_0 = arith.constant 0 : index
    %0 = vector.load %arg1[%c0, %c0_0] : memref<8x32xf32, #tpu.memory_space<vmem>>, vector<8x32xf32>
    %c0_1 = arith.constant 0 : index
    %c0_2 = arith.constant 0 : index
    %1 = vector.load %arg2[%c0_1, %c0_2] : memref<32x256xf32, #tpu.memory_space<vmem>>, vector<32x256xf32>
    %cst = arith.constant dense<0.000000e+00> : vector<8x256xf32>
    %2 = tpu.matmul %0, %1, %cst {dimension_numbers = #tpu.dot_dimension_numbers<[1], [0], [0], [1], [0, 0, 1, 1], [], []>} : vector<8x32xf32>, vector<32x256xf32>, vector<8x256xf32> -> vector<8x256xf32>
    %c0_3 = arith.constant 0 : index
    %c0_4 = arith.constant 0 : index
    %3 = vector.load %arg3[%c0_3, %c0_4] : memref<1x256xf32, #tpu.memory_space<vmem>>, vector<1x256xf32>
    %4 = vector.broadcast %3 : vector<1x256xf32> to vector<8x256xf32>
    %5 = arith.addf %2, %4 : vector<8x256xf32>
    %6 = math.tanh %5 : vector<8x256xf32>
    %c0_5 = arith.constant 0 : index
    %c0_6 = arith.constant 0 : index
    %7 = vector.load %arg4[%c0_5, %c0_6] : memref<256x128xf32, #tpu.memory_space<vmem>>, vector<256x128xf32>
    %cst_7 = arith.constant dense<0.000000e+00> : vector<8x128xf32>
    %8 = tpu.matmul %6, %7, %cst_7 {dimension_numbers = #tpu.dot_dimension_numbers<[1], [0], [0], [1], [0, 0, 1, 1], [], []>} : vector<8x256xf32>, vector<256x128xf32>, vector<8x128xf32> -> vector<8x128xf32>
    %c0_8 = arith.constant 0 : index
    %c0_9 = arith.constant 0 : index
    %9 = vector.load %arg5[%c0_8, %c0_9] : memref<1x128xf32, #tpu.memory_space<vmem>>, vector<1x128xf32>
    %10 = vector.broadcast %9 : vector<1x128xf32> to vector<8x128xf32>
    %11 = arith.addf %8, %10 : vector<8x128xf32>
    %12 = math.tanh %11 : vector<8x128xf32>
    %c0_10 = arith.constant 0 : index
    %c0_11 = arith.constant 0 : index
    %13 = vector.load %arg6[%c0_10, %c0_11] : memref<8x128xf32, #tpu.memory_space<vmem>>, vector<8x128xf32>
    tpu.vector_store %arg6[%c0_10, %c0_11], %12 {strides = array<i32>} : memref<8x128xf32, #tpu.memory_space<vmem>>, vector<8x128xf32>,
    return
  }
  func.func @transform_0(%arg0: i32) -> (i32, i32) {
    %c0_i32 = arith.constant 0 : i32
    %c0_i32_0 = arith.constant 0 : i32
    return %arg0, %c0_i32 : i32, i32
  }
  func.func @transform_1(%arg0: i32) -> (i32, i32) {
    %c0_i32 = arith.constant 0 : i32
    %c0_i32_0 = arith.constant 0 : i32
    %c0_i32_1 = arith.constant 0 : i32
    return %c0_i32, %c0_i32_0 : i32, i32
  }
  func.func @transform_2(%arg0: i32) -> (i32, i32) {
    %c0_i32 = arith.constant 0 : i32
    %c0_i32_0 = arith.constant 0 : i32
    %c0_i32_1 = arith.constant 0 : i32
    return %c0_i32, %c0_i32_0 : i32, i32
  }
  func.func @transform_3(%arg0: i32) -> (i32, i32) {
    %c0_i32 = arith.constant 0 : i32
    %c0_i32_0 = arith.constant 0 : i32
    %c0_i32_1 = arith.constant 0 : i32
    return %c0_i32, %c0_i32_0 : i32, i32
  }
  func.func @transform_4(%arg0: i32) -> (i32, i32) {
    %c0_i32 = arith.constant 0 : i32
    %c0_i32_0 = arith.constant 0 : i32
    %c0_i32_1 = arith.constant 0 : i32
    return %c0_i32, %c0_i32_0 : i32, i32
  }
  func.func @transform_5(%arg0: i32) -> (i32, i32) {
    %c0_i32 = arith.constant 0 : i32
    %c0_i32_0 = arith.constant 0 : i32
    return %arg0, %c0_i32 : i32, i32
  }
}

</mosaic_0001>

<llo_original>
// kernel: actor_forward.1
$region0: #{actor_forward.1}
  #allocation0 [shape = 'u32[]', space=smem, size = 0x4, offset = 0x4, fixed_abs, tag = 'smem constant byte address 0x4 - core index']
  #allocation1 [shape = 'u32[144,128]{1,0:T(1,128)}', space=vmem, size = 0x12000, scoped, tag = 'internal scratch']
  %s0 = inlined_call_operand.hbm [shape: f32[8,32], index: 0, kind: input, shape index: {}]
  %s1 = inlined_call_operand.hbm [shape: f32[32,256], index: 1, kind: input, shape index: {}]
  %s2 = inlined_call_operand.vmem [shape: f32[1,256], index: 2, kind: input, shape index: {}]
  %s3 = inlined_call_operand.hbm [shape: f32[256,128], index: 3, kind: input, shape index: {}]
  %s4 = inlined_call_operand.vmem [shape: f32[1,128], index: 4, kind: input, shape index: {}]
  %s5 = inlined_call_operand.hbm [shape: f32[8,128], index: 5, kind: output, shape index: {}]
  %s6 = sld [smem:[#allocation0]]
  $region42: #{actor_forward.1} parent=0
    _
  %s8 = ssub.s32 1, %s6
  %s9 = scalar_select 0, %s8, %s6
  $region1: #{actor_forward.1} parent=0
    #allocation2 [shape = 'u8[4096]{0}', space=vmem, size = 0x1000, scoped, tag = 'input window, operand 0, single buffered']
    #allocation3 [shape = 's32[1]{0}', space=sflag, size = 0x4, scoped, tag = 'scoped memory for actor_forward.1']
    #allocation4 [shape = 's32[1]{0}', space=sflag, size = 0x4, scoped, tag = 'scoped memory for actor_forward.1']
    #allocation5 [shape = 'u8[32768]{0}', space=vmem, size = 0x8000, scoped, tag = 'input window, operand 1, single buffered']
    #allocation6 [shape = 's32[1]{0}', space=sflag, size = 0x4, scoped, tag = 'scoped memory for actor_forward.1']
    #allocation7 [shape = 'u8[131072]{0}', space=vmem, size = 0x20000, scoped, tag = 'input window, operand 3, single buffered']
    #allocation8 [shape = 'u8[4096]{0}', space=vmem, size = 0x1000, scoped, tag = 'output window, operand 0, single buffered']
    %10 = vsyncpa [#allocation3], 0
    %11 = vsyncpa [#allocation6], 0
    %12 = vsyncpa [#allocation4], 0
    // Predicated region
    $region2: #{actor_forward.1} parent=1 // pred_check
      _
    $region3: #{actor_forward.1} parent=1 // pred_check_branch
      %14 = sbr.rel (0) target = $region5
    $region4: #{actor_forward.1} parent=1 // pred_region
      %s16 = ssub.s32 128, 128
      %17 = vsyncadd [#allocation3], %s16
      %s19 = sshll.u32 [#allocation2], 4
      %s20 = int_to_ptr.vmem [resolvable:$true] %s19
      %22 = dma.hbm_to_vmem [thread:$0]  %s0, 128, %s20, [#allocation3]
    $region5: #{actor_forward.1} parent=1 // pred_fallthru
      _
    // Predicated region
    $region6: #{actor_forward.1} parent=1 // pred_check
      _
    $region7: #{actor_forward.1} parent=1 // pred_check_branch
      %24 = sbr.rel (0) target = $region9
    $region8: #{actor_forward.1} parent=1 // pred_region
      %s26 = ssub.s32 1024, 1024
      %27 = vsyncadd [#allocation6], %s26
      %s28 = sshll.u32 [#allocation5], 4
      %s29 = int_to_ptr.vmem [resolvable:$true] %s28
      %34 = dma.hbm_to_vmem [thread:$0]  %s1, 1024, %s29, [#allocation6], 256, 256, 16
    $region9: #{actor_forward.1} parent=1 // pred_fallthru
      _
    // Predicated region
    $region10: #{actor_forward.1} parent=1 // pred_check
      _
    $region11: #{actor_forward.1} parent=1 // pred_check_branch
      %36 = sbr.rel (0) target = $region13
    $region12: #{actor_forward.1} parent=1 // pred_region
      _
    $region13: #{actor_forward.1} parent=1 // pred_fallthru
      _
    // Predicated region
    $region14: #{actor_forward.1} parent=1 // pred_check
      _
    $region15: #{actor_forward.1} parent=1 // pred_check_branch
      %38 = sbr.rel (0) target = $region17
    $region16: #{actor_forward.1} parent=1 // pred_region
      %s40 = ssub.s32 4096, 4096
      %41 = vsyncadd [#allocation6], %s40
      %s42 = sshll.u32 [#allocation7], 4
      %s43 = int_to_ptr.vmem [resolvable:$true] %s42
      %48 = dma.hbm_to_vmem [thread:$0]  %s3, 4096, %s43, [#allocation6], 128, 128, 8
    $region17: #{actor_forward.1} parent=1 // pred_fallthru
      _
    // Predicated region
    $region18: #{actor_forward.1} parent=1 // pred_check
      _
    $region19: #{actor_forward.1} parent=1 // pred_check_branch
      %50 = sbr.rel (0) target = $region21
    $region20: #{actor_forward.1} parent=1 // pred_region
      _
    $region21: #{actor_forward.1} parent=1 // pred_fallthru
      _
    // Predicated region
    $region22: #{actor_forward.1} parent=1 // pred_check
      _
    $region23: #{actor_forward.1} parent=1 // pred_check_branch
      %52 = sbr.rel (0) target = $region25
    $region24: #{actor_forward.1} parent=1 // pred_region
      %53 = dma.done [#allocation3], 128
    $region25: #{actor_forward.1} parent=1 // pred_fallthru
      _
    // Predicated region
    $region26: #{actor_forward.1} parent=1 // pred_check
      _
    $region27: #{actor_forward.1} parent=1 // pred_check_branch
      %55 = sbr.rel (0) target = $region29
    $region28: #{actor_forward.1} parent=1 // pred_region
      %56 = dma.done [#allocation6], 1024
    $region29: #{actor_forward.1} parent=1 // pred_fallthru
      _
    // Predicated region
    $region30: #{actor_forward.1} parent=1 // pred_check
      _
    $region31: #{actor_forward.1} parent=1 // pred_check_branch
      %58 = sbr.rel (0) target = $region33
    $region32: #{actor_forward.1} parent=1 // pred_region
      %59 = dma.done [#allocation6], 4096
    $region33: #{actor_forward.1} parent=1 // pred_fallthru
      _
    %v60 = vld [vmem:[#allocation2] sm:$0xff]
    %v61 = vld [vmem:[#allocation5] sm:$0xff]
    %v62 = vld [vmem:[#allocation5 + $0x8] sm:$0xff]
    %v63 = vld [vmem:[#allocation5 + $0x10] sm:$0xff]
    %v64 = vld [vmem:[#allocation5 + $0x18] sm:$0xff]
    %v65 = vld [vmem:[#allocation5 + $0x20] sm:$0xff]
    %v66 = vld [vmem:[#allocation5 + $0x28] sm:$0xff]
    %v67 = vld [vmem:[#allocation5 + $0x30] sm:$0xff]
    %v68 = vld [vmem:[#allocation5 + $0x38] sm:$0xff]
    %v69 = vld [vmem:[%s2] sm:$0x3]
    %v71 = vlaneseq
    %v72 = vshrl.u32 %v71, 7
    %v73 = vsub.s32 0, %v72
    %v74 = vrot.slane %v69, %v73
    %v75 = vlaneseq
    %v76 = vshrl.u32 %v75, 7
    %v77 = vsub.s32 1, %v76
    %v78 = vrot.slane %v69, %v77
    %vm81 = vcmask 261120
    %v83 = vsel %vm81, %v60, 0
    %85 = vmatprep.subr.mxu0 0.0
    %86 = vmatpush1.msra.mxu0 0.0
    %87 = vmatprep.subr.mxu0 0.0
    %88 = vmatpush1.msra.mxu0 0.0
    %89 = vmatprep.subr.mxu0 0.0
    %90 = vmatpush1.msra.mxu0 0.0
    %91 = vmatprep.subr.mxu0 0.0
    %92 = vmatpush1.msra.mxu0 0.0
    %93 = vmatprep.subr.mxu0 0.0
    %94 = vmatpush1.msra.mxu0 0.0
    %95 = vmatprep.subr.mxu0 0.0
    %96 = vmatpush1.msra.mxu0 0.0
    %97 = vmatprep.subr.mxu0 0.0
    %98 = vmatpush1.msra.mxu0 0.0
    %99 = vmatprep.subr.mxu0 0.0
    %100 = vmatpush1.msra.mxu0 0.0
    %101 = vmatprep.subr.mxu0 0.0
    %102 = vmatpush1.msra.mxu0 0.0
    %103 = vmatprep.subr.mxu0 0.0
    %104 = vmatpush1.msra.mxu0 0.0
    %105 = vmatprep.subr.mxu0 0.0
    %106 = vmatpush1.msra.mxu0 0.0
    %107 = vmatprep.subr.mxu0 0.0
    %108 = vmatpush1.msra.mxu0 0.0
    %109 = vmatprep.subr.mxu0 %v68
    %110 = vmatpush1.msra.mxu0 %v67
    %111 = vmatprep.subr.mxu0 %v66
    %112 = vmatpush1.msra.mxu0 %v65
    %113 = vmatprep.subr.mxu0 %v64
    %114 = vmatpush1.msra.mxu0 %v63
    %115 = vmatprep.subr.mxu0 %v62
    %116 = vmatpush1.msra.mxu0 %v61
    %117 = vmatprep.subr.mxu0 0.0
    %118 = vmatpush2.msra.mxu0 0.0
    %119 = vmatprep.subr.mxu0 0.0
    %120 = vmatpush2.msra.mxu0 0.0
    %121 = vmatprep.subr.mxu0 0.0
    %122 = vmatpush2.msra.mxu0 0.0
    %123 = vmatprep.subr.mxu0 0.0
    %124 = vmatpush2.msra.mxu0 0.0
    %125 = vmatprep.subr.mxu0 0.0
    %126 = vmatpush2.msra.mxu0 0.0
    %127 = vmatprep.subr.mxu0 0.0
    %128 = vmatpush2.msra.mxu0 0.0
    %129 = vmatprep.subr.mxu0 0.0
    %130 = vmatpush2.msra.mxu0 0.0
    %131 = vmatprep.subr.mxu0 0.0
    %132 = vmatpush2.msra.mxu0 0.0
    %133 = vmatprep.subr.mxu0 0.0
    %134 = vmatpush2.msra.mxu0 0.0
    %135 = vmatprep.subr.mxu0 0.0
    %136 = vmatpush2.msra.mxu0 0.0
    %137 = vmatprep.subr.mxu0 0.0
    %138 = vmatpush2.msra.mxu0 0.0
    %139 = vmatprep.subr.mxu0 0.0
    %140 = vmatpush2.msra.mxu0 0.0
    %141 = vmatprep.subr.mxu0 0.0
    %142 = vmatpush2.msra.mxu0 0.0
    %143 = vmatprep.subr.mxu0 0.0
    %144 = vmatpush2.msra.mxu0 0.0
    %145 = vmatprep.subr.mxu0 0.0
    %146 = vmatpush2.msra.mxu0 0.0
    %147 = vmatprep.subr.mxu0 0.0
    %148 = vmatpush2.msra.mxu0 0.0
    %149 = vmatprep.mubr.f32.mxu0 0.0
    %150 = vmatmul.mubr.f32.gmra.mxu0 %v83
    %v151 = vpop.f32.mrf.mxu0
    %v152 = vadd.f32 %v74, %v151
    %v153 = vpop.f32.mrf.mxu0
    %v154 = vadd.f32 %v78, %v153
    %155 = vdwg.mxu0
    %v156 = vtanh.pop %v152
    %v157 = vtanh.pop %v154
    %v158 = vld [vmem:[#allocation7] sm:$0xff]
    %v159 = vld [vmem:[#allocation7 + $0x8] sm:$0xff]
    %v160 = vld [vmem:[#allocation7 + $0x10] sm:$0xff]
    %v161 = vld [vmem:[#allocation7 + $0x18] sm:$0xff]
    %v162 = vld [vmem:[#allocation7 + $0x20] sm:$0xff]
    %v163 = vld [vmem:[#allocation7 + $0x28] sm:$0xff]
    %v164 = vld [vmem:[#allocation7 + $0x30] sm:$0xff]
    %v165 = vld [vmem:[#allocation7 + $0x38] sm:$0xff]
    %v166 = vld [vmem:[#allocation7 + $0x40] sm:$0xff]
    %v167 = vld [vmem:[#allocation7 + $0x48] sm:$0xff]
    %v168 = vld [vmem:[#allocation7 + $0x50] sm:$0xff]
    %v169 = vld [vmem:[#allocation7 + $0x58] sm:$0xff]
    %v170 = vld [vmem:[#allocation7 + $0x60] sm:$0xff]
    %v171 = vld [vmem:[#allocation7 + $0x68] sm:$0xff]
    %v172 = vld [vmem:[#allocation7 + $0x70] sm:$0xff]
    %v173 = vld [vmem:[#allocation7 + $0x78] sm:$0xff]
    %v174 = vld [vmem:[#allocation7 + $0x80] sm:$0xff]
    %v175 = vld [vmem:[#allocation7 + $0x88] sm:$0xff]
    %v176 = vld [vmem:[#allocation7 + $0x90] sm:$0xff]
    %v177 = vld [vmem:[#allocation7 + $0x98] sm:$0xff]
    %v178 = vld [vmem:[#allocation7 + $0xa0] sm:$0xff]
    %v179 = vld [vmem:[#allocation7 + $0xa8] sm:$0xff]
    %v180 = vld [vmem:[#allocation7 + $0xb0] sm:$0xff]
    %v181 = vld [vmem:[#allocation7 + $0xb8] sm:$0xff]
    %v182 = vld [vmem:[#allocation7 + $0xc0] sm:$0xff]
    %v183 = vld [vmem:[#allocation7 + $0xc8] sm:$0xff]
    %v184 = vld [vmem:[#allocation7 + $0xd0] sm:$0xff]
    %v185 = vld [vmem:[#allocation7 + $0xd8] sm:$0xff]
    %v186 = vld [vmem:[#allocation7 + $0xe0] sm:$0xff]
    %v187 = vld [vmem:[#allocation7 + $0xe8] sm:$0xff]
    %v188 = vld [vmem:[#allocation7 + $0xf0] sm:$0xff]
    %v189 = vld [vmem:[#allocation7 + $0xf8] sm:$0xff]
    %v190 = vld [vmem:[%s4] sm:$0x1]
    %v192 = vlaneseq
    %v193 = vshrl.u32 %v192, 7
    %v194 = vsub.s32 0, %v193
    %v195 = vrot.slane %v190, %v194
    %197 = vmatprep.subr.mxu0 0.0
    %198 = vmatpush1.msra.mxu0 %v173
    %199 = vmatprep.subr.mxu0 0.0
    %200 = vmatpush1.msra.mxu0 %v172
    %201 = vmatprep.subr.mxu0 0.0
    %202 = vmatpush1.msra.mxu0 %v171
    %203 = vmatprep.subr.mxu0 0.0
    %204 = vmatpush1.msra.mxu0 %v170
    %205 = vmatprep.subr.mxu0 0.0
    %206 = vmatpush1.msra.mxu0 %v169
    %207 = vmatprep.subr.mxu0 0.0
    %208 = vmatpush1.msra.mxu0 %v168
    %209 = vmatprep.subr.mxu0 0.0
    %210 = vmatpush1.msra.mxu0 %v167
    %211 = vmatprep.subr.mxu0 0.0
    %212 = vmatpush1.msra.mxu0 %v166
    %213 = vmatprep.subr.mxu0 0.0
    %214 = vmatpush1.msra.mxu0 %v165
    %215 = vmatprep.subr.mxu0 0.0
    %216 = vmatpush1.msra.mxu0 %v164
    %217 = vmatprep.subr.mxu0 0.0
    %218 = vmatpush1.msra.mxu0 %v163
    %219 = vmatprep.subr.mxu0 0.0
    %220 = vmatpush1.msra.mxu0 %v162
    %221 = vmatprep.subr.mxu0 0.0
    %222 = vmatpush1.msra.mxu0 %v161
    %223 = vmatprep.subr.mxu0 0.0
    %224 = vmatpush1.msra.mxu0 %v160
    %225 = vmatprep.subr.mxu0 0.0
    %226 = vmatpush1.msra.mxu0 %v159
    %227 = vmatprep.subr.mxu0 0.0
    %228 = vmatpush1.msra.mxu0 %v158
    %229 = vmatprep.subr.mxu0 0.0
    %230 = vmatpush2.msra.mxu0 %v189
    %231 = vmatprep.subr.mxu0 0.0
    %232 = vmatpush2.msra.mxu0 %v188
    %233 = vmatprep.subr.mxu0 0.0
    %234 = vmatpush2.msra.mxu0 %v187
    %235 = vmatprep.subr.mxu0 0.0
    %236 = vmatpush2.msra.mxu0 %v186
    %237 = vmatprep.subr.mxu0 0.0
    %238 = vmatpush2.msra.mxu0 %v185
    %239 = vmatprep.subr.mxu0 0.0
    %240 = vmatpush2.msra.mxu0 %v184
    %241 = vmatprep.subr.mxu0 0.0
    %242 = vmatpush2.msra.mxu0 %v183
    %243 = vmatprep.subr.mxu0 0.0
    %244 = vmatpush2.msra.mxu0 %v182
    %245 = vmatprep.subr.mxu0 0.0
    %246 = vmatpush2.msra.mxu0 %v181
    %247 = vmatprep.subr.mxu0 0.0
    %248 = vmatpush2.msra.mxu0 %v180
    %249 = vmatprep.subr.mxu0 0.0
    %250 = vmatpush2.msra.mxu0 %v179
    %251 = vmatprep.subr.mxu0 0.0
    %252 = vmatpush2.msra.mxu0 %v178
    %253 = vmatprep.subr.mxu0 0.0
    %254 = vmatpush2.msra.mxu0 %v177
    %255 = vmatprep.subr.mxu0 0.0
    %256 = vmatpush2.msra.mxu0 %v176
    %257 = vmatprep.subr.mxu0 0.0
    %258 = vmatpush2.msra.mxu0 %v175
    %259 = vmatprep.subr.mxu0 0.0
    %260 = vmatpush2.msra.mxu0 %v174
    %261 = vmatprep.mubr.f32.mxu0 %v157
    %262 = vmatmul.mubr.f32.gmra.mxu0 %v156
    %v263 = vpop.f32.mrf.mxu0
    %v264 = vadd.f32 %v195, %v263
    %v265 = vpop.f32.mrf.mxu0
    %266 = vdwg.mxu0
    %v267 = vtanh.pop %v264
    %268 = vst [vmem:[#allocation8] sm:$0xff] %v267
    // Predicated region
    $region34: #{actor_forward.1} parent=1 // pred_check
      _
    $region35: #{actor_forward.1} parent=1 // pred_check_branch
      %270 = sbr.rel (0) target = $region37
    $region36: #{actor_forward.1} parent=1 // pred_region
      %s272 = ssub.s32 128, 128
      %273 = vsyncadd [#allocation4], %s272
      %s275 = sshll.u32 [#allocation8], 4
      %s276 = int_to_ptr.vmem [resolvable:$true] %s275
      %278 = dma.vmem_to_hbm [thread:$0]  %s276, 128, %s5, [#allocation4]
    $region37: #{actor_forward.1} parent=1 // pred_fallthru
      _
    // Predicated region
    $region38: #{actor_forward.1} parent=1 // pred_check
      _
    $region39: #{actor_forward.1} parent=1 // pred_check_branch
      %280 = sbr.rel (0) target = $region41
    $region40: #{actor_forward.1} parent=1 // pred_region
      %281 = dma.done [#allocation4], 128
    $region41: #{actor_forward.1} parent=1 // pred_fallthru
      _
    %282 = vsyncpa [#allocation3], 1
    %283 = vsyncpa [#allocation6], 1
    %284 = vsyncpa [#allocation4], 1

</llo_original>
